<compile_context>
chip_gen: v6e
topology: v6e:2x2x1
jax: 0.10.0
libtpu: 0.0.40
codegen_flags: <defaults>
</compile_context>

<pallas_src>
import jax
import jax.numpy as jnp
from jax.experimental import pallas as pl
from jax.experimental.pallas import tpu as pltpu


F_CONV = 400        # backend feature width required by the encoder
F_CONV_PAD = 512    # lane-dense (multiple of 128) fconv width
NC_PAD = 128        # lane-dense logits width


def _round_up(n, m):
    return ((n + m - 1) // m) * m


def volume_kernel(x_ref, wb_ref, bb_ref,
                  w1_ref, b1_ref, w2_ref, b2_ref,
                  wc_ref, wca_ref, wcg_ref, bc_ref,
                  age_ref, gender_ref,
                  logits_ref, fconv_ref):
    # backend stand-in: Linear(C*T -> 512 (padded 400)) + ReLU   (bf16 MXU path)
    xb = x_ref[...].astype(jnp.bfloat16)
    f = jnp.dot(xb, wb_ref[...], preferred_element_type=jnp.float32) + bb_ref[...]
    f = jnp.maximum(f, 0.0)
    fconv_ref[...] = f                       # lane-dense (512-wide) store

    # encoder: Linear(400,128)+ReLU+Dropout(eval=id), Linear(128,16)+ReLU+Dropout(eval=id)
    h1 = jnp.dot(f.astype(jnp.bfloat16), w1_ref[...],
                 preferred_element_type=jnp.float32) + b1_ref[...]
    h1 = jnp.maximum(h1, 0.0)
    h2 = jnp.dot(h1.astype(jnp.bfloat16), w2_ref[...],
                 preferred_element_type=jnp.float32) + b2_ref[...]
    h2 = jnp.maximum(h2, 0.0)

    # classifier: concat([h2, age, gender]) @ Wc  folded into
    #   h2 @ Wc_h + age * wc_age + gender * wc_gender + bc   (epilogue in-kernel)
    out = jnp.dot(h2.astype(jnp.bfloat16), wc_ref[...],
                  preferred_element_type=jnp.float32)
    out = out + age_ref[...] * wca_ref[...] + gender_ref[...] * wcg_ref[...] + bc_ref[...]
    logits_ref[...] = out                    # lane-dense (128-wide) store


def _resident_spec(a):
    # Full-array block with a constant index map: stays VMEM-resident across
    # the batch grid (Pallas does not re-fetch an unchanged block index).
    n = a.ndim
    return pl.BlockSpec(a.shape, lambda i: (0,) * n)


def volume_model_forward(x, age, gender, channel, kparams, *, num_classes):
    # `channel` is unused by the original forward; kept for signature parity.
    del channel
    B, T, C = x.shape
    K = T * C

    wb, bb = kparams["wb"], kparams["bb"]
    w1, b1 = kparams["w1"], kparams["b1"]
    w2, b2 = kparams["w2"], kparams["b2"]
    wc_h, wc_age = kparams["wc_h"], kparams["wc_age"]
    wc_gender, bc = kparams["wc_gender"], kparams["bc"]
    assert wb.shape[0] == K, "backend weight / input size mismatch"
    f_pad = bb.shape[1]
    nc_pad = bc.shape[1]

    # No transpose: wb rows were permuted once at prep time to consume the
    # natural (B, T*C) flattening of x.
    x_flat = x.reshape(B, K).astype(jnp.float32)
    age2 = age.reshape(B, 1).astype(jnp.float32)
    gender2 = gender.reshape(B, 1).astype(jnp.float32)

    # Batch tiling: TB=256 fills the MXU M dimension and keeps per-step VMEM
    # (~3 MB incl. double buffers) far under v7x's 64 MiB; small batches get a
    # single 8-row-aligned tile.
    TB = 256 if B >= 256 else _round_up(B, 8)
    B_pad = _round_up(B, TB)
    if B_pad != B:
        pad = ((0, B_pad - B), (0, 0))
        x_flat = jnp.pad(x_flat, pad)
        age2 = jnp.pad(age2, pad)
        gender2 = jnp.pad(gender2, pad)
    grid = (B_pad // TB,)

    def batch_spec(n_lane):
        return pl.BlockSpec((TB, n_lane), lambda i: (i, 0))

    in_specs = [
        batch_spec(K),                                   # x tile
        _resident_spec(wb), _resident_spec(bb),
        _resident_spec(w1), _resident_spec(b1),
        _resident_spec(w2), _resident_spec(b2),
        _resident_spec(wc_h), _resident_spec(wc_age),
        _resident_spec(wc_gender), _resident_spec(bc),
        batch_spec(1),                                   # age tile
        batch_spec(1),                                   # gender tile
    ]
    out_specs = (batch_spec(nc_pad), batch_spec(f_pad))
    out_shape = (jax.ShapeDtypeStruct((B_pad, nc_pad), jnp.float32),
                 jax.ShapeDtypeStruct((B_pad, f_pad), jnp.float32))

    logits_p, fconv_p = pl.pallas_call(
        volume_kernel,
        grid=grid,
        in_specs=in_specs,
        out_specs=out_specs,
        out_shape=out_shape,
        compiler_params=pltpu.CompilerParams(
            dimension_semantics=("parallel",)),
    )(x_flat, wb, bb, w1, b1, w2, b2, wc_h, wc_age, wc_gender, bc,
      age2, gender2)

    # Slice away batch padding and the lane padding added for dense stores.
    return logits_p[:B, :num_classes], fconv_p[:B, :F_CONV]


def init_params(key, T, C, num_classes):
    """Original-orientation f32 parameters (as the PyTorch module would hold)."""
    ks = jax.random.split(key, 8)
    scale = 0.05

    def lin(kw, kb, fan_in, fan_out):
        w = jax.random.normal(kw, (fan_in, fan_out), jnp.float32) * scale
        b = jax.random.normal(kb, (1, fan_out), jnp.float32) * scale
        return w, b

    wb, bb = lin(ks[0], ks[1], C * T, F_CONV)     # synthetic backend
    w1, b1 = lin(ks[2], ks[3], F_CONV, 128)       # encoder[0]
    w2, b2 = lin(ks[4], ks[5], 128, 16)           # encoder[3]
    wc, bc = lin(ks[6], ks[7], 16 + 2, num_classes)   # classifier(18 -> C)
    return {"wb": wb, "bb": bb, "w1": w1, "b1": b1,
            "w2": w2, "b2": b2, "wc": wc, "bc": bc}


def prepare_params(params, T, C):
    """One-time weight prep (checkpoint-load time, not per-forward):
       * fold transpose(x,1,2)+flatten into a row permutation of wb,
       * pad output lane dims to multiples of 128,
       * cast matmul weights to bf16 (biases / rank-1 terms stay f32)."""
    K = C * T
    wb, bb = params["wb"], params["bb"]
    w1, w2 = params["w1"], params["w2"]
    wc, bc = params["wc"], params["bc"]
    h2 = w2.shape[1]

    # Kernel consumes x.reshape(B, T*C) (row j = t*C + c); the original backend
    # consumed flatten(transpose(x)) (row i = c*T + t).  Permute rows once.
    j = jnp.arange(K)
    t, c = j // C, j % C
    wb_perm = wb[c * T + t, :]

    def pad_cols(a, n):
        return jnp.pad(a, ((0, 0), (0, n - a.shape[1])))

    def pad_rows(a, n):
        return jnp.pad(a, ((0, n - a.shape[0]), (0, 0)))

    return {
        "wb": pad_cols(wb_perm, F_CONV_PAD).astype(jnp.bfloat16),
        "bb": pad_cols(bb, F_CONV_PAD),
        "w1": pad_rows(w1, F_CONV_PAD).astype(jnp.bfloat16),
        "b1": params["b1"],
        "w2": w2.astype(jnp.bfloat16),
        "b2": params["b2"],
        "wc_h": pad_cols(wc[:h2, :], NC_PAD).astype(jnp.bfloat16),
        "wc_age": pad_cols(wc[h2:h2 + 1, :], NC_PAD),
        "wc_gender": pad_cols(wc[h2 + 1:h2 + 2, :], NC_PAD),
        "bc": pad_cols(bc, NC_PAD),
    }


def reference_forward(x, age, gender, params):
    """Pure-JAX reference on the ORIGINAL params (transpose path, concat
    classifier), emulating the kernel's bf16-in / f32-accumulate dots."""
    B, T, C = x.shape

    def mm(a, w):
        return jnp.dot(a.astype(jnp.bfloat16).astype(jnp.float32),
                       w.astype(jnp.bfloat16).astype(jnp.float32))

    x_t = jnp.transpose(x, (0, 2, 1)).reshape(B, C * T)
    f = jnp.maximum(mm(x_t, params["wb"]) + params["bb"], 0.0)
    h1 = jnp.maximum(mm(f, params["w1"]) + params["b1"], 0.0)
    h2 = jnp.maximum(mm(h1, params["w2"]) + params["b2"], 0.0)
    wc = params["wc"]
    logits = (mm(h2, wc[:16]) + age.reshape(B, 1) * wc[16:17]
              + gender.reshape(B, 1) * wc[17:18] + params["bc"])
    return logits, f


if __name__ == "__main__":
    key = jax.random.PRNGKey(0)
    k_x, k_age, k_gen, k_p = jax.random.split(key, 4)

    B, T, C = 4, 16, 25          # C * T = 400 -> backend flattens to 400 features
    num_classes = 3

    x = jax.random.normal(k_x, (B, T, C), jnp.float32)
    age = jax.random.uniform(k_age, (B,), jnp.float32)
    gender = (jax.random.uniform(k_gen, (B,)) > 0.5).astype(jnp.float32)
    channel = jnp.zeros((B,), jnp.float32)   # unused by forward (parity only)

    params = init_params(k_p, T, C, num_classes)
    kparams = prepare_params(params, T, C)

    fwd = jax.jit(volume_model_forward, static_argnames=("num_classes",))
    logits, f_conv = fwd(x, age, gender, channel, kparams,
                         num_classes=num_classes)
    jax.block_until_ready((logits, f_conv))

    ref_logits, ref_fconv = reference_forward(x, age, gender, params)
    assert logits.shape == (B, num_classes) and f_conv.shape == (B, F_CONV)
    assert jnp.allclose(logits, ref_logits, atol=2e-2, rtol=2e-2), \
        float(jnp.max(jnp.abs(logits - ref_logits)))
    assert jnp.allclose(f_conv, ref_fconv, atol=2e-2, rtol=2e-2), \
        float(jnp.max(jnp.abs(f_conv - ref_fconv)))

    print("KERNEL_OK")
</pallas_src>

<mosaic_0001>
module attributes {stable_mosaic.version = 11 : i64} {
  func.func @volume_kernel(%arg0: i32, %arg1: memref<8x400xf32, #tpu.memory_space<vmem>>, %arg2: memref<400x512xbf16, #tpu.memory_space<vmem>>, %arg3: memref<1x512xf32, #tpu.memory_space<vmem>>, %arg4: memref<512x128xbf16, #tpu.memory_space<vmem>>, %arg5: memref<1x128xf32, #tpu.memory_space<vmem>>, %arg6: memref<128x16xbf16, #tpu.memory_space<vmem>>, %arg7: memref<1x16xf32, #tpu.memory_space<vmem>>, %arg8: memref<16x128xbf16, #tpu.memory_space<vmem>>, %arg9: memref<1x128xf32, #tpu.memory_space<vmem>>, %arg10: memref<1x128xf32, #tpu.memory_space<vmem>>, %arg11: memref<1x128xf32, #tpu.memory_space<vmem>>, %arg12: memref<8x1xf32, #tpu.memory_space<vmem>>, %arg13: memref<8x1xf32, #tpu.memory_space<vmem>>, %arg14: memref<8x128xf32, #tpu.memory_space<vmem>>, %arg15: memref<8x512xf32, #tpu.memory_space<vmem>>) attributes {dimension_semantics = [#tpu.dimension_semantics<parallel>], iteration_bounds = array<i64: 1>, scalar_prefetch = 0 : i64, scratch_operands = 0 : i64, tpu.core_type = #tpu.core_type<tc>, window_params = [{transform_indices = @transform_0, window_bounds = array<i64: 8, 400>}, {pipeline_mode = #tpu.pipeline_mode<synchronous>, transform_indices = @transform_1, window_bounds = array<i64: 400, 512>}, {pipeline_mode = #tpu.pipeline_mode<synchronous>, transform_indices = @transform_2, window_bounds = array<i64: 1, 512>}, {pipeline_mode = #tpu.pipeline_mode<synchronous>, transform_indices = @transform_3, window_bounds = array<i64: 512, 128>}, {pipeline_mode = #tpu.pipeline_mode<synchronous>, transform_indices = @transform_4, window_bounds = array<i64: 1, 128>}, {pipeline_mode = #tpu.pipeline_mode<synchronous>, transform_indices = @transform_5, window_bounds = array<i64: 128, 16>}, {pipeline_mode = #tpu.pipeline_mode<synchronous>, transform_indices = @transform_6, window_bounds = array<i64: 1, 16>}, {pipeline_mode = #tpu.pipeline_mode<synchronous>, transform_indices = @transform_7, window_bounds = array<i64: 16, 128>}, {pipeline_mode = #tpu.pipeline_mode<synchronous>, transform_indices = @transform_8, window_bounds = array<i64: 1, 128>}, {pipeline_mode = #tpu.pipeline_mode<synchronous>, transform_indices = @transform_9, window_bounds = array<i64: 1, 128>}, {pipeline_mode = #tpu.pipeline_mode<synchronous>, transform_indices = @transform_10, window_bounds = array<i64: 1, 128>}, {transform_indices = @transform_11, window_bounds = array<i64: 8, 1>}, {transform_indices = @transform_12, window_bounds = array<i64: 8, 1>}, {transform_indices = @transform_13, window_bounds = array<i64: 8, 128>}, {transform_indices = @transform_14, window_bounds = array<i64: 8, 512>}]} {
    %c0 = arith.constant 0 : index
    %c0_0 = arith.constant 0 : index
    %0 = vector.load %arg1[%c0, %c0_0] : memref<8x400xf32, #tpu.memory_space<vmem>>, vector<8x400xf32>
    %1 = arith.truncf %0 : vector<8x400xf32> to vector<8x400xbf16>
    %c0_1 = arith.constant 0 : index
    %c0_2 = arith.constant 0 : index
    %2 = vector.load %arg2[%c0_1, %c0_2] : memref<400x512xbf16, #tpu.memory_space<vmem>>, vector<400x512xbf16>
    %cst = arith.constant dense<0.000000e+00> : vector<8x512xf32>
    %3 = tpu.matmul %1, %2, %cst {dimension_numbers = #tpu.dot_dimension_numbers<[1], [0], [0], [1], [0, 0, 1, 1], [], []>} : vector<8x400xbf16>, vector<400x512xbf16>, vector<8x512xf32> -> vector<8x512xf32>
    %c0_3 = arith.constant 0 : index
    %c0_4 = arith.constant 0 : index
    %4 = vector.load %arg3[%c0_3, %c0_4] : memref<1x512xf32, #tpu.memory_space<vmem>>, vector<1x512xf32>
    %5 = vector.broadcast %4 : vector<1x512xf32> to vector<8x512xf32>
    %6 = arith.addf %3, %5 : vector<8x512xf32>
    %cst_5 = arith.constant 0.000000e+00 : f32
    %7 = vector.broadcast %cst_5 : f32 to vector<8x512xf32>
    %8 = arith.maximumf %6, %7 : vector<8x512xf32>
    %c0_6 = arith.constant 0 : index
    %c0_7 = arith.constant 0 : index
    %9 = vector.load %arg15[%c0_6, %c0_7] : memref<8x512xf32, #tpu.memory_space<vmem>>, vector<8x512xf32>
    tpu.vector_store %arg15[%c0_6, %c0_7], %8 {strides = array<i32>} : memref<8x512xf32, #tpu.memory_space<vmem>>, vector<8x512xf32>,
    %10 = arith.truncf %8 : vector<8x512xf32> to vector<8x512xbf16>
    %c0_8 = arith.constant 0 : index
    %c0_9 = arith.constant 0 : index
    %11 = vector.load %arg4[%c0_8, %c0_9] : memref<512x128xbf16, #tpu.memory_space<vmem>>, vector<512x128xbf16>
    %cst_10 = arith.constant dense<0.000000e+00> : vector<8x128xf32>
    %12 = tpu.matmul %10, %11, %cst_10 {dimension_numbers = #tpu.dot_dimension_numbers<[1], [0], [0], [1], [0, 0, 1, 1], [], []>} : vector<8x512xbf16>, vector<512x128xbf16>, vector<8x128xf32> -> vector<8x128xf32>
    %c0_11 = arith.constant 0 : index
    %c0_12 = arith.constant 0 : index
    %13 = vector.load %arg5[%c0_11, %c0_12] : memref<1x128xf32, #tpu.memory_space<vmem>>, vector<1x128xf32>
    %14 = vector.broadcast %13 : vector<1x128xf32> to vector<8x128xf32>
    %15 = arith.addf %12, %14 : vector<8x128xf32>
    %cst_13 = arith.constant 0.000000e+00 : f32
    %16 = vector.broadcast %cst_13 : f32 to vector<8x128xf32>
    %17 = arith.maximumf %15, %16 : vector<8x128xf32>
    %18 = arith.truncf %17 : vector<8x128xf32> to vector<8x128xbf16>
    %c0_14 = arith.constant 0 : index
    %c0_15 = arith.constant 0 : index
    %19 = vector.load %arg6[%c0_14, %c0_15] : memref<128x16xbf16, #tpu.memory_space<vmem>>, vector<128x16xbf16>
    %cst_16 = arith.constant dense<0.000000e+00> : vector<8x16xf32>
    %20 = tpu.matmul %18, %19, %cst_16 {dimension_numbers = #tpu.dot_dimension_numbers<[1], [0], [0], [1], [0, 0, 1, 1], [], []>} : vector<8x128xbf16>, vector<128x16xbf16>, vector<8x16xf32> -> vector<8x16xf32>
    %c0_17 = arith.constant 0 : index
    %c0_18 = arith.constant 0 : index
    %21 = vector.load %arg7[%c0_17, %c0_18] : memref<1x16xf32, #tpu.memory_space<vmem>>, vector<1x16xf32>
    %22 = vector.broadcast %21 : vector<1x16xf32> to vector<8x16xf32>
    %23 = arith.addf %20, %22 : vector<8x16xf32>
    %cst_19 = arith.constant 0.000000e+00 : f32
    %24 = vector.broadcast %cst_19 : f32 to vector<8x16xf32>
    %25 = arith.maximumf %23, %24 : vector<8x16xf32>
    %26 = arith.truncf %25 : vector<8x16xf32> to vector<8x16xbf16>
    %c0_20 = arith.constant 0 : index
    %c0_21 = arith.constant 0 : index
    %27 = vector.load %arg8[%c0_20, %c0_21] : memref<16x128xbf16, #tpu.memory_space<vmem>>, vector<16x128xbf16>
    %cst_22 = arith.constant dense<0.000000e+00> : vector<8x128xf32>
    %28 = tpu.matmul %26, %27, %cst_22 {dimension_numbers = #tpu.dot_dimension_numbers<[1], [0], [0], [1], [0, 0, 1, 1], [], []>} : vector<8x16xbf16>, vector<16x128xbf16>, vector<8x128xf32> -> vector<8x128xf32>
    %c0_23 = arith.constant 0 : index
    %c0_24 = arith.constant 0 : index
    %29 = vector.load %arg12[%c0_23, %c0_24] : memref<8x1xf32, #tpu.memory_space<vmem>>, vector<8x1xf32>
    %c0_25 = arith.constant 0 : index
    %c0_26 = arith.constant 0 : index
    %30 = vector.load %arg9[%c0_25, %c0_26] : memref<1x128xf32, #tpu.memory_space<vmem>>, vector<1x128xf32>
    %31 = vector.broadcast %29 : vector<8x1xf32> to vector<8x128xf32>
    %32 = vector.broadcast %30 : vector<1x128xf32> to vector<8x128xf32>
    %33 = arith.mulf %31, %32 : vector<8x128xf32>
    %34 = arith.addf %28, %33 : vector<8x128xf32>
    %c0_27 = arith.constant 0 : index
    %c0_28 = arith.constant 0 : index
    %35 = vector.load %arg13[%c0_27, %c0_28] : memref<8x1xf32, #tpu.memory_space<vmem>>, vector<8x1xf32>
    %c0_29 = arith.constant 0 : index
    %c0_30 = arith.constant 0 : index
    %36 = vector.load %arg10[%c0_29, %c0_30] : memref<1x128xf32, #tpu.memory_space<vmem>>, vector<1x128xf32>
    %37 = vector.broadcast %35 : vector<8x1xf32> to vector<8x128xf32>
    %38 = vector.broadcast %36 : vector<1x128xf32> to vector<8x128xf32>
    %39 = arith.mulf %37, %38 : vector<8x128xf32>
    %40 = arith.addf %34, %39 : vector<8x128xf32>
    %c0_31 = arith.constant 0 : index
    %c0_32 = arith.constant 0 : index
    %41 = vector.load %arg11[%c0_31, %c0_32] : memref<1x128xf32, #tpu.memory_space<vmem>>, vector<1x128xf32>
    %42 = vector.broadcast %41 : vector<1x128xf32> to vector<8x128xf32>
    %43 = arith.addf %40, %42 : vector<8x128xf32>
    %c0_33 = arith.constant 0 : index
    %c0_34 = arith.constant 0 : index
    %44 = vector.load %arg14[%c0_33, %c0_34] : memref<8x128xf32, #tpu.memory_space<vmem>>, vector<8x128xf32>
    tpu.vector_store %arg14[%c0_33, %c0_34], %43 {strides = array<i32>} : memref<8x128xf32, #tpu.memory_space<vmem>>, vector<8x128xf32>,
    return
  }
  func.func @transform_0(%arg0: i32) -> (i32, i32) {
    %c0_i32 = arith.constant 0 : i32
    %c0_i32_0 = arith.constant 0 : i32
    return %arg0, %c0_i32 : i32, i32
  }
  func.func @transform_1(%arg0: i32) -> (i32, i32) {
    %c0_i32 = arith.constant 0 : i32
    %c0_i32_0 = arith.constant 0 : i32
    %c0_i32_1 = arith.constant 0 : i32
    return %c0_i32, %c0_i32_0 : i32, i32
  }
  func.func @transform_2(%arg0: i32) -> (i32, i32) {
    %c0_i32 = arith.constant 0 : i32
    %c0_i32_0 = arith.constant 0 : i32
    %c0_i32_1 = arith.constant 0 : i32
    return %c0_i32, %c0_i32_0 : i32, i32
  }
  func.func @transform_3(%arg0: i32) -> (i32, i32) {
    %c0_i32 = arith.constant 0 : i32
    %c0_i32_0 = arith.constant 0 : i32
    %c0_i32_1 = arith.constant 0 : i32
    return %c0_i32, %c0_i32_0 : i32, i32
  }
  func.func @transform_4(%arg0: i32) -> (i32, i32) {
    %c0_i32 = arith.constant 0 : i32
    %c0_i32_0 = arith.constant 0 : i32
    %c0_i32_1 = arith.constant 0 : i32
    return %c0_i32, %c0_i32_0 : i32, i32
  }
  func.func @transform_5(%arg0: i32) -> (i32, i32) {
    %c0_i32 = arith.constant 0 : i32
    %c0_i32_0 = arith.constant 0 : i32
    %c0_i32_1 = arith.constant 0 : i32
    return %c0_i32, %c0_i32_0 : i32, i32
  }
  func.func @transform_6(%arg0: i32) -> (i32, i32) {
    %c0_i32 = arith.constant 0 : i32
    %c0_i32_0 = arith.constant 0 : i32
    %c0_i32_1 = arith.constant 0 : i32
    return %c0_i32, %c0_i32_0 : i32, i32
  }
  func.func @transform_7(%arg0: i32) -> (i32, i32) {
    %c0_i32 = arith.constant 0 : i32
    %c0_i32_0 = arith.constant 0 : i32
    %c0_i32_1 = arith.constant 0 : i32
    return %c0_i32, %c0_i32_0 : i32, i32
  }
  func.func @transform_8(%arg0: i32) -> (i32, i32) {
    %c0_i32 = arith.constant 0 : i32
    %c0_i32_0 = arith.constant 0 : i32
    %c0_i32_1 = arith.constant 0 : i32
    return %c0_i32, %c0_i32_0 : i32, i32
  }
  func.func @transform_9(%arg0: i32) -> (i32, i32) {
    %c0_i32 = arith.constant 0 : i32
    %c0_i32_0 = arith.constant 0 : i32
    %c0_i32_1 = arith.constant 0 : i32
    return %c0_i32, %c0_i32_0 : i32, i32
  }
  func.func @transform_10(%arg0: i32) -> (i32, i32) {
    %c0_i32 = arith.constant 0 : i32
    %c0_i32_0 = arith.constant 0 : i32
    %c0_i32_1 = arith.constant 0 : i32
    return %c0_i32, %c0_i32_0 : i32, i32
  }
  func.func @transform_11(%arg0: i32) -> (i32, i32) {
    %c0_i32 = arith.constant 0 : i32
    %c0_i32_0 = arith.constant 0 : i32
    return %arg0, %c0_i32 : i32, i32
  }
  func.func @transform_12(%arg0: i32) -> (i32, i32) {
    %c0_i32 = arith.constant 0 : i32
    %c0_i32_0 = arith.constant 0 : i32
    return %arg0, %c0_i32 : i32, i32
  }
  func.func @transform_13(%arg0: i32) -> (i32, i32) {
    %c0_i32 = arith.constant 0 : i32
    %c0_i32_0 = arith.constant 0 : i32
    return %arg0, %c0_i32 : i32, i32
  }
  func.func @transform_14(%arg0: i32) -> (i32, i32) {
    %c0_i32 = arith.constant 0 : i32
    %c0_i32_0 = arith.constant 0 : i32
    return %arg0, %c0_i32 : i32, i32
  }
}

</mosaic_0001>

<llo_original>
// kernel: volume_model_forward.1
$region0: #{volume_model_forward.1}
  #allocation0 [shape = 'u32[]', space=smem, size = 0x4, offset = 0x4, fixed_abs, tag = 'smem constant byte address 0x4 - core index']
  #allocation1 [shape = 'u32[144,128]{1,0:T(1,128)}', space=vmem, size = 0x12000, scoped, tag = 'internal scratch']
  %s0 = inlined_call_operand.vmem [shape: f32[8,400], index: 0, kind: input, shape index: {}]
  %s1 = inlined_call_operand.hbm [shape: bf16[400,512], index: 1, kind: input, shape index: {}]
  %s2 = inlined_call_operand.vmem [shape: f32[1,512], index: 2, kind: input, shape index: {}]
  %s3 = inlined_call_operand.hbm [shape: bf16[512,128], index: 3, kind: input, shape index: {}]
  %s4 = inlined_call_operand.vmem [shape: f32[1,128], index: 4, kind: input, shape index: {}]
  %s5 = inlined_call_operand.vmem [shape: bf16[128,16], index: 5, kind: input, shape index: {}]
  %s6 = inlined_call_operand.vmem [shape: f32[1,16], index: 6, kind: input, shape index: {}]
  %s7 = inlined_call_operand.vmem [shape: bf16[16,128], index: 7, kind: input, shape index: {}]
  %s8 = inlined_call_operand.vmem [shape: f32[1,128], index: 8, kind: input, shape index: {}]
  %s9 = inlined_call_operand.vmem [shape: f32[1,128], index: 9, kind: input, shape index: {}]
  %s10 = inlined_call_operand.vmem [shape: f32[1,128], index: 10, kind: input, shape index: {}]
  %s11 = inlined_call_operand.vmem [shape: f32[8,1], index: 11, kind: input, shape index: {}]
  %s12 = inlined_call_operand.vmem [shape: f32[8,1], index: 12, kind: input, shape index: {}]
  %s13 = inlined_call_operand.vmem [shape: f32[8,128], index: 13, kind: output, shape index: {0}]
  %s14 = inlined_call_operand.vmem [shape: f32[8,512], index: 14, kind: output, shape index: {1}]
  %15 = xla_tuple %s13, %s14
  %s16 = sld [smem:[#allocation0]]
  $region78: #{volume_model_forward.1} parent=0
    _
  %s18 = ssub.s32 1, %s16
  %s19 = scalar_select 0, %s18, %s16
  $region1: #{volume_model_forward.1} parent=0
    #allocation2 [shape = 'u8[409600]{0}', space=vmem, size = 0x64000, scoped, tag = 'input window, operand 1, single buffered']
    #allocation3 [shape = 's32[1]{0}', space=sflag, size = 0x4, scoped, tag = 'scoped memory for volume_model_forward.1']
    #allocation4 [shape = 'u8[131072]{0}', space=vmem, size = 0x20000, scoped, tag = 'input window, operand 3, single buffered']
    #allocation5 [shape = 's32[1]{0}', space=sflag, size = 0x4, scoped, tag = 'scoped memory for volume_model_forward.1']
    %20 = vsyncpa [#allocation3], 0
    %21 = vsyncpa [#allocation5], 0
    // Predicated region
    $region2: #{volume_model_forward.1} parent=1 // pred_check
      _
    $region3: #{volume_model_forward.1} parent=1 // pred_check_branch
      %23 = sbr.rel (0) target = $region5
    $region4: #{volume_model_forward.1} parent=1 // pred_region
      _
    $region5: #{volume_model_forward.1} parent=1 // pred_fallthru
      _
    // Predicated region
    $region6: #{volume_model_forward.1} parent=1 // pred_check
      _
    $region7: #{volume_model_forward.1} parent=1 // pred_check_branch
      %25 = sbr.rel (0) target = $region9
    $region8: #{volume_model_forward.1} parent=1 // pred_region
      %s27 = ssub.s32 12800, 12800
      %28 = vsyncadd [#allocation3], %s27
      %s29 = sshll.u32 [#allocation2], 4
      %s30 = int_to_ptr.vmem [resolvable:$true] %s29
      %35 = dma.hbm_to_vmem [thread:$0]  %s1, 12800, %s30, [#allocation3], 256, 256, 16
    $region9: #{volume_model_forward.1} parent=1 // pred_fallthru
      _
    // Predicated region
    $region10: #{volume_model_forward.1} parent=1 // pred_check
      _
    $region11: #{volume_model_forward.1} parent=1 // pred_check_branch
      %37 = sbr.rel (0) target = $region13
    $region12: #{volume_model_forward.1} parent=1 // pred_region
      _
    $region13: #{volume_model_forward.1} parent=1 // pred_fallthru
      _
    // Predicated region
    $region14: #{volume_model_forward.1} parent=1 // pred_check
      _
    $region15: #{volume_model_forward.1} parent=1 // pred_check_branch
      %39 = sbr.rel (0) target = $region17
    $region16: #{volume_model_forward.1} parent=1 // pred_region
      %s41 = ssub.s32 4096, 4096
      %42 = vsyncadd [#allocation5], %s41
      %s43 = sshll.u32 [#allocation4], 4
      %s44 = int_to_ptr.vmem [resolvable:$true] %s43
      %49 = dma.hbm_to_vmem [thread:$0]  %s3, 4096, %s44, [#allocation5], 64, 64, 4
    $region17: #{volume_model_forward.1} parent=1 // pred_fallthru
      _
    // Predicated region
    $region18: #{volume_model_forward.1} parent=1 // pred_check
      _
    $region19: #{volume_model_forward.1} parent=1 // pred_check_branch
      %51 = sbr.rel (0) target = $region21
    $region20: #{volume_model_forward.1} parent=1 // pred_region
      _
    $region21: #{volume_model_forward.1} parent=1 // pred_fallthru
      _
    // Predicated region
    $region22: #{volume_model_forward.1} parent=1 // pred_check
      _
    $region23: #{volume_model_forward.1} parent=1 // pred_check_branch
      %53 = sbr.rel (0) target = $region25
    $region24: #{volume_model_forward.1} parent=1 // pred_region
      _
    $region25: #{volume_model_forward.1} parent=1 // pred_fallthru
      _
    // Predicated region
    $region26: #{volume_model_forward.1} parent=1 // pred_check
      _
    $region27: #{volume_model_forward.1} parent=1 // pred_check_branch
      %55 = sbr.rel (0) target = $region29
    $region28: #{volume_model_forward.1} parent=1 // pred_region
      _
    $region29: #{volume_model_forward.1} parent=1 // pred_fallthru
      _
    // Predicated region
    $region30: #{volume_model_forward.1} parent=1 // pred_check
      _
    $region31: #{volume_model_forward.1} parent=1 // pred_check_branch
      %57 = sbr.rel (0) target = $region33
    $region32: #{volume_model_forward.1} parent=1 // pred_region
      _
    $region33: #{volume_model_forward.1} parent=1 // pred_fallthru
      _
    // Predicated region
    $region34: #{volume_model_forward.1} parent=1 // pred_check
      _
    $region35: #{volume_model_forward.1} parent=1 // pred_check_branch
      %59 = sbr.rel (0) target = $region37
    $region36: #{volume_model_forward.1} parent=1 // pred_region
      _
    $region37: #{volume_model_forward.1} parent=1 // pred_fallthru
      _
    // Predicated region
    $region38: #{volume_model_forward.1} parent=1 // pred_check
      _
    $region39: #{volume_model_forward.1} parent=1 // pred_check_branch
      %61 = sbr.rel (0) target = $region41
    $region40: #{volume_model_forward.1} parent=1 // pred_region
      _
    $region41: #{volume_model_forward.1} parent=1 // pred_fallthru
      _
    // Predicated region
    $region42: #{volume_model_forward.1} parent=1 // pred_check
      _
    $region43: #{volume_model_forward.1} parent=1 // pred_check_branch
      %63 = sbr.rel (0) target = $region45
    $region44: #{volume_model_forward.1} parent=1 // pred_region
      _
    $region45: #{volume_model_forward.1} parent=1 // pred_fallthru
      _
    // Predicated region
    $region46: #{volume_model_forward.1} parent=1 // pred_check
      _
    $region47: #{volume_model_forward.1} parent=1 // pred_check_branch
      %65 = sbr.rel (0) target = $region49
    $region48: #{volume_model_forward.1} parent=1 // pred_region
      _
    $region49: #{volume_model_forward.1} parent=1 // pred_fallthru
      _
    // Predicated region
    $region50: #{volume_model_forward.1} parent=1 // pred_check
      _
    $region51: #{volume_model_forward.1} parent=1 // pred_check_branch
      %67 = sbr.rel (0) target = $region53
    $region52: #{volume_model_forward.1} parent=1 // pred_region
      _
    $region53: #{volume_model_forward.1} parent=1 // pred_fallthru
      _
    // Predicated region
    $region54: #{volume_model_forward.1} parent=1 // pred_check
      _
    $region55: #{volume_model_forward.1} parent=1 // pred_check_branch
      %69 = sbr.rel (0) target = $region57
    $region56: #{volume_model_forward.1} parent=1 // pred_region
      %70 = dma.done [#allocation3], 12800
    $region57: #{volume_model_forward.1} parent=1 // pred_fallthru
      _
    // Predicated region
    $region58: #{volume_model_forward.1} parent=1 // pred_check
      _
    $region59: #{volume_model_forward.1} parent=1 // pred_check_branch
      %72 = sbr.rel (0) target = $region61
    $region60: #{volume_model_forward.1} parent=1 // pred_region
      %73 = dma.done [#allocation5], 4096
    $region61: #{volume_model_forward.1} parent=1 // pred_fallthru
      _
    %v75 = vld [vmem:[%s0] sm:$0xff]
    %v76 = vld [vmem:[%s0 + $0x8] sm:$0xff]
    %v77 = vld [vmem:[%s0 + $0x10] sm:$0xff]
    %v78 = vld [vmem:[%s0 + $0x18] sm:$0xff]
    %v79 = vpack.c.bf16 %v75, %v75
    %v80 = vpack.c.bf16 %v76, %v76
    %v81 = vpack.c.bf16 %v77, %v77
    %v82 = vpack.c.bf16 %v78, %v78
    %v83 = vld [vmem:[#allocation2] sm:$0xff]
    %v84 = vld [vmem:[#allocation2 + $0x8] sm:$0xff]
    %v85 = vld [vmem:[#allocation2 + $0x10] sm:$0xff]
    %v86 = vld [vmem:[#allocation2 + $0x18] sm:$0xff]
    %v87 = vld [vmem:[#allocation2 + $0x20] sm:$0xff]
    %v88 = vld [vmem:[#allocation2 + $0x28] sm:$0xff]
    %v89 = vld [vmem:[#allocation2 + $0x30] sm:$0xff]
    %v90 = vld [vmem:[#allocation2 + $0x38] sm:$0xff]
    %v91 = vld [vmem:[#allocation2 + $0x40] sm:$0xff]
    %v92 = vld [vmem:[#allocation2 + $0x48] sm:$0xff]
    %v93 = vld [vmem:[#allocation2 + $0x50] sm:$0xff]
    %v94 = vld [vmem:[#allocation2 + $0x58] sm:$0xff]
    %v95 = vld [vmem:[#allocation2 + $0x60] sm:$0xff]
    %v96 = vld [vmem:[#allocation2 + $0x68] sm:$0xff]
    %v97 = vld [vmem:[#allocation2 + $0x70] sm:$0xff]
    %v98 = vld [vmem:[#allocation2 + $0x78] sm:$0xff]
    %v99 = vld [vmem:[#allocation2 + $0x80] sm:$0xff]
    %v100 = vld [vmem:[#allocation2 + $0x88] sm:$0xff]
    %v101 = vld [vmem:[#allocation2 + $0x90] sm:$0xff]
    %v102 = vld [vmem:[#allocation2 + $0x98] sm:$0xff]
    %v103 = vld [vmem:[#allocation2 + $0xa0] sm:$0xff]
    %v104 = vld [vmem:[#allocation2 + $0xa8] sm:$0xff]
    %v105 = vld [vmem:[#allocation2 + $0xb0] sm:$0xff]
    %v106 = vld [vmem:[#allocation2 + $0xb8] sm:$0xff]
    %v107 = vld [vmem:[#allocation2 + $0xc0] sm:$0xff]
    %v108 = vld [vmem:[#allocation2 + $0xc8] sm:$0xff]
    %v109 = vld [vmem:[#allocation2 + $0xd0] sm:$0xff]
    %v110 = vld [vmem:[#allocation2 + $0xd8] sm:$0xff]
    %v111 = vld [vmem:[#allocation2 + $0xe0] sm:$0xff]
    %v112 = vld [vmem:[#allocation2 + $0xe8] sm:$0xff]
    %v113 = vld [vmem:[#allocation2 + $0xf0] sm:$0xff]
    %v114 = vld [vmem:[#allocation2 + $0xf8] sm:$0xff]
    %v115 = vld [vmem:[#allocation2 + $0x100] sm:$0xff]
    %v116 = vld [vmem:[#allocation2 + $0x108] sm:$0xff]
    %v117 = vld [vmem:[#allocation2 + $0x110] sm:$0xff]
    %v118 = vld [vmem:[#allocation2 + $0x118] sm:$0xff]
    %v119 = vld [vmem:[#allocation2 + $0x120] sm:$0xff]
    %v120 = vld [vmem:[#allocation2 + $0x128] sm:$0xff]
    %v121 = vld [vmem:[#allocation2 + $0x130] sm:$0xff]
    %v122 = vld [vmem:[#allocation2 + $0x138] sm:$0xff]
    %v123 = vld [vmem:[#allocation2 + $0x140] sm:$0xff]
    %v124 = vld [vmem:[#allocation2 + $0x148] sm:$0xff]
    %v125 = vld [vmem:[#allocation2 + $0x150] sm:$0xff]
    %v126 = vld [vmem:[#allocation2 + $0x158] sm:$0xff]
    %v127 = vld [vmem:[#allocation2 + $0x160] sm:$0xff]
    %v128 = vld [vmem:[#allocation2 + $0x168] sm:$0xff]
    %v129 = vld [vmem:[#allocation2 + $0x170] sm:$0xff]
    %v130 = vld [vmem:[#allocation2 + $0x178] sm:$0xff]
    %v131 = vld [vmem:[#allocation2 + $0x180] sm:$0xff]
    %v132 = vld [vmem:[#allocation2 + $0x188] sm:$0xff]
    %v133 = vld [vmem:[#allocation2 + $0x190] sm:$0xff]
    %v134 = vld [vmem:[#allocation2 + $0x198] sm:$0xff]
    %v135 = vld [vmem:[#allocation2 + $0x1a0] sm:$0xff]
    %v136 = vld [vmem:[#allocation2 + $0x1a8] sm:$0xff]
    %v137 = vld [vmem:[#allocation2 + $0x1b0] sm:$0xff]
    %v138 = vld [vmem:[#allocation2 + $0x1b8] sm:$0xff]
    %v139 = vld [vmem:[#allocation2 + $0x1c0] sm:$0xff]
    %v140 = vld [vmem:[#allocation2 + $0x1c8] sm:$0xff]
    %v141 = vld [vmem:[#allocation2 + $0x1d0] sm:$0xff]
    %v142 = vld [vmem:[#allocation2 + $0x1d8] sm:$0xff]
    %v143 = vld [vmem:[#allocation2 + $0x1e0] sm:$0xff]
    %v144 = vld [vmem:[#allocation2 + $0x1e8] sm:$0xff]
    %v145 = vld [vmem:[#allocation2 + $0x1f0] sm:$0xff]
    %v146 = vld [vmem:[#allocation2 + $0x1f8] sm:$0xff]
    %v147 = vld [vmem:[#allocation2 + $0x200] sm:$0xff]
    %v148 = vld [vmem:[#allocation2 + $0x208] sm:$0xff]
    %v149 = vld [vmem:[#allocation2 + $0x210] sm:$0xff]
    %v150 = vld [vmem:[#allocation2 + $0x218] sm:$0xff]
    %v151 = vld [vmem:[#allocation2 + $0x220] sm:$0xff]
    %v152 = vld [vmem:[#allocation2 + $0x228] sm:$0xff]
    %v153 = vld [vmem:[#allocation2 + $0x230] sm:$0xff]
    %v154 = vld [vmem:[#allocation2 + $0x238] sm:$0xff]
    %v155 = vld [vmem:[#allocation2 + $0x240] sm:$0xff]
    %v156 = vld [vmem:[#allocation2 + $0x248] sm:$0xff]
    %v157 = vld [vmem:[#allocation2 + $0x250] sm:$0xff]
    %v158 = vld [vmem:[#allocation2 + $0x258] sm:$0xff]
    %v159 = vld [vmem:[#allocation2 + $0x260] sm:$0xff]
    %v160 = vld [vmem:[#allocation2 + $0x268] sm:$0xff]
    %v161 = vld [vmem:[#allocation2 + $0x270] sm:$0xff]
    %v162 = vld [vmem:[#allocation2 + $0x278] sm:$0xff]
    %v163 = vld [vmem:[#allocation2 + $0x280] sm:$0xff]
    %v164 = vld [vmem:[#allocation2 + $0x288] sm:$0xff]
    %v165 = vld [vmem:[#allocation2 + $0x290] sm:$0xff]
    %v166 = vld [vmem:[#allocation2 + $0x298] sm:$0xff]
    %v167 = vld [vmem:[#allocation2 + $0x2a0] sm:$0xff]
    %v168 = vld [vmem:[#allocation2 + $0x2a8] sm:$0xff]
    %v169 = vld [vmem:[#allocation2 + $0x2b0] sm:$0xff]
    %v170 = vld [vmem:[#allocation2 + $0x2b8] sm:$0xff]
    %v171 = vld [vmem:[#allocation2 + $0x2c0] sm:$0xff]
    %v172 = vld [vmem:[#allocation2 + $0x2c8] sm:$0xff]
    %v173 = vld [vmem:[#allocation2 + $0x2d0] sm:$0xff]
    %v174 = vld [vmem:[#allocation2 + $0x2d8] sm:$0xff]
    %v175 = vld [vmem:[#allocation2 + $0x2e0] sm:$0xff]
    %v176 = vld [vmem:[#allocation2 + $0x2e8] sm:$0xff]
    %v177 = vld [vmem:[#allocation2 + $0x2f0] sm:$0xff]
    %v178 = vld [vmem:[#allocation2 + $0x2f8] sm:$0xff]
    %v179 = vld [vmem:[#allocation2 + $0x300] sm:$0xff]
    %v180 = vld [vmem:[#allocation2 + $0x308] sm:$0xff]
    %v181 = vld [vmem:[#allocation2 + $0x310] sm:$0xff]
    %v182 = vld [vmem:[#allocation2 + $0x318] sm:$0xff]
    %v183 = vld [vmem:[%s2] sm:$0xf]
    %v185 = vlaneseq
    %v186 = vshrl.u32 %v185, 7
    %v187 = vsub.s32 0, %v186
    %v188 = vrot.slane %v183, %v187
    %v189 = vlaneseq
    %v190 = vshrl.u32 %v189, 7
    %v191 = vsub.s32 1, %v190
    %v192 = vrot.slane %v183, %v191
    %v193 = vlaneseq
    %v194 = vshrl.u32 %v193, 7
    %v195 = vsub.s32 2, %v194
    %v196 = vrot.slane %v183, %v195
    %v197 = vlaneseq
    %v198 = vshrl.u32 %v197, 7
    %v199 = vsub.s32 3, %v198
    %v200 = vrot.slane %v183, %v199
    %v305 = vunpack.c.l.b16 %v83
    %v306 = vunpack.c.h.b16 %v83
    %v307 = vunpack.c.l.b16 %v84
    %v308 = vunpack.c.h.b16 %v84
    %v309 = vunpack.c.l.b16 %v85
    %v310 = vunpack.c.h.b16 %v85
    %v311 = vunpack.c.l.b16 %v86
    %v312 = vunpack.c.h.b16 %v86
    %v313 = vunpack.c.l.b16 %v87
    %v314 = vunpack.c.h.b16 %v87
    %v315 = vunpack.c.l.b16 %v88
    %v316 = vunpack.c.h.b16 %v88
    %v317 = vunpack.c.l.b16 %v89
    %v318 = vunpack.c.h.b16 %v89
    %v319 = vunpack.c.l.b16 %v90
    %v320 = vunpack.c.h.b16 %v90
    %v321 = vunpack.c.l.b16 %v91
    %v322 = vunpack.c.h.b16 %v91
    %v323 = vunpack.c.l.b16 %v92
    %v324 = vunpack.c.h.b16 %v92
    %v325 = vunpack.c.l.b16 %v93
    %v326 = vunpack.c.h.b16 %v93
    %v327 = vunpack.c.l.b16 %v94
    %v328 = vunpack.c.h.b16 %v94
    %v329 = vunpack.c.l.b16 %v95
    %v330 = vunpack.c.h.b16 %v95
    %v331 = vunpack.c.l.b16 %v96
    %v332 = vunpack.c.h.b16 %v96
    %v333 = vunpack.c.l.b16 %v97
    %v334 = vunpack.c.h.b16 %v97
    %v335 = vunpack.c.l.b16 %v98
    %v336 = vunpack.c.h.b16 %v98
    %v337 = vunpack.c.l.b16 %v99
    %v338 = vunpack.c.h.b16 %v99
    %v339 = vunpack.c.l.b16 %v100
    %v340 = vunpack.c.h.b16 %v100
    %v341 = vunpack.c.l.b16 %v101
    %v342 = vunpack.c.h.b16 %v101
    %v343 = vunpack.c.l.b16 %v102
    %v344 = vunpack.c.h.b16 %v102
    %v345 = vunpack.c.l.b16 %v103
    %v346 = vunpack.c.h.b16 %v103
    %v347 = vunpack.c.l.b16 %v104
    %v348 = vunpack.c.h.b16 %v104
    %v349 = vunpack.c.l.b16 %v105
    %v350 = vunpack.c.h.b16 %v105
    %v351 = vunpack.c.l.b16 %v106
    %v352 = vunpack.c.h.b16 %v106
    %v353 = vunpack.c.l.b16 %v107
    %v354 = vunpack.c.h.b16 %v107
    %v355 = vunpack.c.l.b16 %v108
    %v356 = vunpack.c.h.b16 %v108
    %v357 = vunpack.c.l.b16 %v109
    %v358 = vunpack.c.h.b16 %v109
    %v359 = vunpack.c.l.b16 %v110
    %v360 = vunpack.c.h.b16 %v110
    %v361 = vunpack.c.l.b16 %v111
    %v362 = vunpack.c.h.b16 %v111
    %v363 = vunpack.c.l.b16 %v112
    %v364 = vunpack.c.h.b16 %v112
    %v365 = vunpack.c.l.b16 %v113
    %v366 = vunpack.c.h.b16 %v113
    %v367 = vunpack.c.l.b16 %v114
    %v368 = vunpack.c.h.b16 %v114
    %v369 = vunpack.c.l.b16 %v115
    %v370 = vunpack.c.h.b16 %v115
    %v371 = vunpack.c.l.b16 %v116
    %v372 = vunpack.c.h.b16 %v116
    %v373 = vunpack.c.l.b16 %v117
    %v374 = vunpack.c.h.b16 %v117
    %v375 = vunpack.c.l.b16 %v118
    %v376 = vunpack.c.h.b16 %v118
    %v377 = vunpack.c.l.b16 %v119
    %v378 = vunpack.c.h.b16 %v119
    %v379 = vunpack.c.l.b16 %v120
    %v380 = vunpack.c.h.b16 %v120
    %v381 = vunpack.c.l.b16 %v121
    %v382 = vunpack.c.h.b16 %v121
    %v383 = vunpack.c.l.b16 %v122
    %v384 = vunpack.c.h.b16 %v122
    %v385 = vunpack.c.l.b16 %v123
    %v386 = vunpack.c.h.b16 %v123
    %v387 = vunpack.c.l.b16 %v124
    %v388 = vunpack.c.h.b16 %v124
    %v389 = vunpack.c.l.b16 %v125
    %v390 = vunpack.c.h.b16 %v125
    %v391 = vunpack.c.l.b16 %v126
    %v392 = vunpack.c.h.b16 %v126
    %v393 = vunpack.c.l.b16 %v127
    %v394 = vunpack.c.h.b16 %v127
    %v395 = vunpack.c.l.b16 %v128
    %v396 = vunpack.c.h.b16 %v128
    %v397 = vunpack.c.l.b16 %v129
    %v398 = vunpack.c.h.b16 %v129
    %v399 = vunpack.c.l.b16 %v130
    %v400 = vunpack.c.h.b16 %v130
    %v401 = vunpack.c.l.b16 %v131
    %v402 = vunpack.c.h.b16 %v131
    %v403 = vunpack.c.l.b16 %v132
    %v404 = vunpack.c.h.b16 %v132
    %v405 = vunpack.c.l.b16 %v133
    %v406 = vunpack.c.h.b16 %v133
    %v407 = vunpack.c.l.b16 %v134
    %v408 = vunpack.c.h.b16 %v134
    %v409 = vunpack.c.l.b16 %v135
    %v410 = vunpack.c.h.b16 %v135
    %v411 = vunpack.c.l.b16 %v136
    %v412 = vunpack.c.h.b16 %v136
    %v413 = vunpack.c.l.b16 %v137
    %v414 = vunpack.c.h.b16 %v137
    %v415 = vunpack.c.l.b16 %v138
    %v416 = vunpack.c.h.b16 %v138
    %v417 = vunpack.c.l.b16 %v139
    %v418 = vunpack.c.h.b16 %v139
    %v419 = vunpack.c.l.b16 %v140
    %v420 = vunpack.c.h.b16 %v140
    %v421 = vunpack.c.l.b16 %v141
    %v422 = vunpack.c.h.b16 %v141
    %v423 = vunpack.c.l.b16 %v142
    %v424 = vunpack.c.h.b16 %v142
    %v425 = vunpack.c.l.b16 %v143
    %v426 = vunpack.c.h.b16 %v143
    %v427 = vunpack.c.l.b16 %v144
    %v428 = vunpack.c.h.b16 %v144
    %v429 = vunpack.c.l.b16 %v145
    %v430 = vunpack.c.h.b16 %v145
    %v431 = vunpack.c.l.b16 %v146
    %v432 = vunpack.c.h.b16 %v146
    %v433 = vunpack.c.l.b16 %v147
    %v434 = vunpack.c.h.b16 %v147
    %v435 = vunpack.c.l.b16 %v148
    %v436 = vunpack.c.h.b16 %v148
    %v437 = vunpack.c.l.b16 %v149
    %v438 = vunpack.c.h.b16 %v149
    %v439 = vunpack.c.l.b16 %v150
    %v440 = vunpack.c.h.b16 %v150
    %v441 = vunpack.c.l.b16 %v151
    %v442 = vunpack.c.h.b16 %v151
    %v443 = vunpack.c.l.b16 %v152
    %v444 = vunpack.c.h.b16 %v152
    %v445 = vunpack.c.l.b16 %v153
    %v446 = vunpack.c.h.b16 %v153
    %v447 = vunpack.c.l.b16 %v154
    %v448 = vunpack.c.h.b16 %v154
    %v449 = vunpack.c.l.b16 %v155
    %v450 = vunpack.c.h.b16 %v155
    %v451 = vunpack.c.l.b16 %v156
    %v452 = vunpack.c.h.b16 %v156
    %v453 = vunpack.c.l.b16 %v157
    %v454 = vunpack.c.h.b16 %v157
    %v455 = vunpack.c.l.b16 %v158
    %v456 = vunpack.c.h.b16 %v158
    %v457 = vunpack.c.l.b16 %v159
    %v458 = vunpack.c.h.b16 %v159
    %v459 = vunpack.c.l.b16 %v160
    %v460 = vunpack.c.h.b16 %v160
    %v461 = vunpack.c.l.b16 %v161
    %v462 = vunpack.c.h.b16 %v161
    %v463 = vunpack.c.l.b16 %v162
    %v464 = vunpack.c.h.b16 %v162
    %v465 = vunpack.c.l.b16 %v163
    %v466 = vunpack.c.h.b16 %v163
    %v467 = vunpack.c.l.b16 %v164
    %v468 = vunpack.c.h.b16 %v164
    %v469 = vunpack.c.l.b16 %v165
    %v470 = vunpack.c.h.b16 %v165
    %v471 = vunpack.c.l.b16 %v166
    %v472 = vunpack.c.h.b16 %v166
    %v473 = vunpack.c.l.b16 %v167
    %v474 = vunpack.c.h.b16 %v167
    %v475 = vunpack.c.l.b16 %v168
    %v476 = vunpack.c.h.b16 %v168
    %v477 = vunpack.c.l.b16 %v169
    %v478 = vunpack.c.h.b16 %v169
    %v479 = vunpack.c.l.b16 %v170
    %v480 = vunpack.c.h.b16 %v170
    %v481 = vunpack.c.l.b16 %v171
    %v482 = vunpack.c.h.b16 %v171
    %v483 = vunpack.c.l.b16 %v172
    %v484 = vunpack.c.h.b16 %v172
    %v485 = vunpack.c.l.b16 %v173
    %v486 = vunpack.c.h.b16 %v173
    %v487 = vunpack.c.l.b16 %v174
    %v488 = vunpack.c.h.b16 %v174
    %v489 = vunpack.c.l.b16 %v175
    %v490 = vunpack.c.h.b16 %v175
    %v491 = vunpack.c.l.b16 %v176
    %v492 = vunpack.c.h.b16 %v176
    %v493 = vunpack.c.l.b16 %v177
    %v494 = vunpack.c.h.b16 %v177
    %v495 = vunpack.c.l.b16 %v178
    %v496 = vunpack.c.h.b16 %v178
    %v497 = vunpack.c.l.b16 %v179
    %v498 = vunpack.c.h.b16 %v179
    %v499 = vunpack.c.l.b16 %v180
    %v500 = vunpack.c.h.b16 %v180
    %v501 = vunpack.c.l.b16 %v181
    %v502 = vunpack.c.h.b16 %v181
    %v503 = vunpack.c.l.b16 %v182
    %v504 = vunpack.c.h.b16 %v182
    %v505 = vpack.c.b16 %v309, %v305
    %v506 = vpack.c.b16 %v310, %v306
    %v507 = vpack.c.b16 %v311, %v307
    %v508 = vpack.c.b16 %v312, %v308
    %v509 = vpack.c.b16 %v317, %v313
    %v510 = vpack.c.b16 %v318, %v314
    %v511 = vpack.c.b16 %v319, %v315
    %v512 = vpack.c.b16 %v320, %v316
    %v513 = vpack.c.b16 %v325, %v321
    %v514 = vpack.c.b16 %v326, %v322
    %v515 = vpack.c.b16 %v327, %v323
    %v516 = vpack.c.b16 %v328, %v324
    %v517 = vpack.c.b16 %v333, %v329
    %v518 = vpack.c.b16 %v334, %v330
    %v519 = vpack.c.b16 %v335, %v331
    %v520 = vpack.c.b16 %v336, %v332
    %v521 = vpack.c.b16 %v341, %v337
    %v522 = vpack.c.b16 %v342, %v338
    %v523 = vpack.c.b16 %v343, %v339
    %v524 = vpack.c.b16 %v344, %v340
    %v525 = vpack.c.b16 %v349, %v345
    %v526 = vpack.c.b16 %v350, %v346
    %v527 = vpack.c.b16 %v351, %v347
    %v528 = vpack.c.b16 %v352, %v348
    %v529 = vpack.c.b16 %v357, %v353
    %v530 = vpack.c.b16 %v358, %v354
    %v531 = vpack.c.b16 %v359, %v355
    %v532 = vpack.c.b16 %v360, %v356
    %v533 = vpack.c.b16 %v365, %v361
    %v534 = vpack.c.b16 %v366, %v362
    %v535 = vpack.c.b16 %v367, %v363
    %v536 = vpack.c.b16 %v368, %v364
    %v537 = vpack.c.b16 %v373, %v369
    %v538 = vpack.c.b16 %v374, %v370
    %v539 = vpack.c.b16 %v375, %v371
    %v540 = vpack.c.b16 %v376, %v372
    %v541 = vpack.c.b16 %v381, %v377
    %v542 = vpack.c.b16 %v382, %v378
    %v543 = vpack.c.b16 %v383, %v379
    %v544 = vpack.c.b16 %v384, %v380
    %v545 = vpack.c.b16 %v389, %v385
    %v546 = vpack.c.b16 %v390, %v386
    %v547 = vpack.c.b16 %v391, %v387
    %v548 = vpack.c.b16 %v392, %v388
    %v549 = vpack.c.b16 %v397, %v393
    %v550 = vpack.c.b16 %v398, %v394
    %v551 = vpack.c.b16 %v399, %v395
    %v552 = vpack.c.b16 %v400, %v396
    %v553 = vpack.c.b16 %v405, %v401
    %v554 = vpack.c.b16 %v406, %v402
    %v555 = vpack.c.b16 %v407, %v403
    %v556 = vpack.c.b16 %v408, %v404
    %v557 = vpack.c.b16 %v413, %v409
    %v558 = vpack.c.b16 %v414, %v410
    %v559 = vpack.c.b16 %v415, %v411
    %v560 = vpack.c.b16 %v416, %v412
    %v561 = vpack.c.b16 %v421, %v417
    %v562 = vpack.c.b16 %v422, %v418
    %v563 = vpack.c.b16 %v423, %v419
    %v564 = vpack.c.b16 %v424, %v420
    %v565 = vpack.c.b16 %v429, %v425
    %v566 = vpack.c.b16 %v430, %v426
    %v567 = vpack.c.b16 %v431, %v427
    %v568 = vpack.c.b16 %v432, %v428
    %v569 = vpack.c.b16 %v437, %v433
    %v570 = vpack.c.b16 %v438, %v434
    %v571 = vpack.c.b16 %v439, %v435
    %v572 = vpack.c.b16 %v440, %v436
    %v573 = vpack.c.b16 %v445, %v441
    %v574 = vpack.c.b16 %v446, %v442
    %v575 = vpack.c.b16 %v447, %v443
    %v576 = vpack.c.b16 %v448, %v444
    %v577 = vpack.c.b16 %v453, %v449
    %v578 = vpack.c.b16 %v454, %v450
    %v579 = vpack.c.b16 %v455, %v451
    %v580 = vpack.c.b16 %v456, %v452
    %v581 = vpack.c.b16 %v461, %v457
    %v582 = vpack.c.b16 %v462, %v458
    %v583 = vpack.c.b16 %v463, %v459
    %v584 = vpack.c.b16 %v464, %v460
    %v585 = vpack.c.b16 %v469, %v465
    %v586 = vpack.c.b16 %v470, %v466
    %v587 = vpack.c.b16 %v471, %v467
    %v588 = vpack.c.b16 %v472, %v468
    %v589 = vpack.c.b16 %v477, %v473
    %v590 = vpack.c.b16 %v478, %v474
    %v591 = vpack.c.b16 %v479, %v475
    %v592 = vpack.c.b16 %v480, %v476
    %v593 = vpack.c.b16 %v485, %v481
    %v594 = vpack.c.b16 %v486, %v482
    %v595 = vpack.c.b16 %v487, %v483
    %v596 = vpack.c.b16 %v488, %v484
    %v597 = vpack.c.b16 %v493, %v489
    %v598 = vpack.c.b16 %v494, %v490
    %v599 = vpack.c.b16 %v495, %v491
    %v600 = vpack.c.b16 %v496, %v492
    %v601 = vpack.c.b16 %v501, %v497
    %v602 = vpack.c.b16 %v502, %v498
    %v603 = vpack.c.b16 %v503, %v499
    %v604 = vpack.c.b16 %v504, %v500
    %vm705 = vcmask 130048
    %v707 = vsel %vm705, %v82, 0
    %709 = vmatprep.subr.bf16.mxu0 %v534
    %710 = vmatpush1.bf16.msra.mxu0 %v533
    %711 = vmatprep.subr.bf16.mxu0 %v530
    %712 = vmatpush1.bf16.msra.mxu0 %v529
    %713 = vmatprep.subr.bf16.mxu0 %v526
    %714 = vmatpush1.bf16.msra.mxu0 %v525
    %715 = vmatprep.subr.bf16.mxu0 %v522
    %716 = vmatpush1.bf16.msra.mxu0 %v521
    %717 = vmatprep.subr.bf16.mxu0 %v518
    %718 = vmatpush1.bf16.msra.mxu0 %v517
    %719 = vmatprep.subr.bf16.mxu0 %v514
    %720 = vmatpush1.bf16.msra.mxu0 %v513
    %721 = vmatprep.subr.bf16.mxu0 %v510
    %722 = vmatpush1.bf16.msra.mxu0 %v509
    %723 = vmatprep.subr.bf16.mxu0 %v506
    %724 = vmatpush1.bf16.msra.mxu0 %v505
    %725 = vmatprep.subr.bf16.mxu0 %v566
    %726 = vmatpush2.bf16.msra.mxu0 %v565
    %727 = vmatprep.subr.bf16.mxu0 %v562
    %728 = vmatpush2.bf16.msra.mxu0 %v561
    %729 = vmatprep.subr.bf16.mxu0 %v558
    %730 = vmatpush2.bf16.msra.mxu0 %v557
    %731 = vmatprep.subr.bf16.mxu0 %v554
    %732 = vmatpush2.bf16.msra.mxu0 %v553
    %733 = vmatprep.subr.bf16.mxu0 %v550
    %734 = vmatpush2.bf16.msra.mxu0 %v549
    %735 = vmatprep.subr.bf16.mxu0 %v546
    %736 = vmatpush2.bf16.msra.mxu0 %v545
    %737 = vmatprep.subr.bf16.mxu0 %v542
    %738 = vmatpush2.bf16.msra.mxu0 %v541
    %739 = vmatprep.subr.bf16.mxu0 %v538
    %740 = vmatpush2.bf16.msra.mxu0 %v537
    %741 = vmatprep.mubr.bf16.mxu0 %v80
    %742 = vmatmul.mubr.bf16.gmra.mxu0 %v79
    %v743 = vpop.f32.mrf.mxu0
    %v744 = vadd.f32 %v188, %v743
    %v745 = vpop.f32.mrf.mxu0
    %v746 = vadd.f32 %v192, %v745
    %v747 = vpop.f32.mrf.mxu0
    %v748 = vpop.f32.mrf.mxu0
    %749 = vdwg.mxu0
    %750 = vmatprep.subr.bf16.mxu0 %v598
    %751 = vmatpush1.bf16.msra.mxu0 %v597
    %752 = vmatprep.subr.bf16.mxu0 %v594
    %753 = vmatpush1.bf16.msra.mxu0 %v593
    %754 = vmatprep.subr.bf16.mxu0 %v590
    %755 = vmatpush1.bf16.msra.mxu0 %v589
    %756 = vmatprep.subr.bf16.mxu0 %v586
    %757 = vmatpush1.bf16.msra.mxu0 %v585
    %758 = vmatprep.subr.bf16.mxu0 %v582
    %759 = vmatpush1.bf16.msra.mxu0 %v581
    %760 = vmatprep.subr.bf16.mxu0 %v578
    %761 = vmatpush1.bf16.msra.mxu0 %v577
    %762 = vmatprep.subr.bf16.mxu0 %v574
    %763 = vmatpush1.bf16.msra.mxu0 %v573
    %764 = vmatprep.subr.bf16.mxu0 %v570
    %765 = vmatpush1.bf16.msra.mxu0 %v569
    %766 = vmatprep.subr.bf16.mxu0 0
    %767 = vmatpush2.bf16.msra.mxu0 0
    %768 = vmatprep.subr.bf16.mxu0 0
    %769 = vmatpush2.bf16.msra.mxu0 0
    %770 = vmatprep.subr.bf16.mxu0 0
    %771 = vmatpush2.bf16.msra.mxu0 0
    %772 = vmatprep.subr.bf16.mxu0 0
    %773 = vmatpush2.bf16.msra.mxu0 0
    %774 = vmatprep.subr.bf16.mxu0 0
    %775 = vmatpush2.bf16.msra.mxu0 0
    %776 = vmatprep.subr.bf16.mxu0 0
    %777 = vmatpush2.bf16.msra.mxu0 0
    %778 = vmatprep.subr.bf16.mxu0 0
    %779 = vmatpush2.bf16.msra.mxu0 0
    %780 = vmatprep.subr.bf16.mxu0 %v602
    %781 = vmatpush2.bf16.msra.mxu0 %v601
    %782 = vmatprep.mubr.bf16.mxu0 %v707
    %783 = vmatmul.mubr.bf16.gmra.mxu0 %v81
    %v784 = vpop.f32.mrf.mxu0
    %v785 = vadd.f32 %v744, %v784
    %v786 = vpop.f32.mrf.mxu0
    %v787 = vadd.f32 %v746, %v786
    %v788 = vpop.f32.mrf.mxu0
    %v789 = vpop.f32.mrf.mxu0
    %790 = vdwg.mxu0
    %791 = vmatprep.subr.bf16.mxu0 %v536
    %792 = vmatpush1.bf16.msra.mxu0 %v535
    %793 = vmatprep.subr.bf16.mxu0 %v532
    %794 = vmatpush1.bf16.msra.mxu0 %v531
    %795 = vmatprep.subr.bf16.mxu0 %v528
    %796 = vmatpush1.bf16.msra.mxu0 %v527
    %797 = vmatprep.subr.bf16.mxu0 %v524
    %798 = vmatpush1.bf16.msra.mxu0 %v523
    %799 = vmatprep.subr.bf16.mxu0 %v520
    %800 = vmatpush1.bf16.msra.mxu0 %v519
    %801 = vmatprep.subr.bf16.mxu0 %v516
    %802 = vmatpush1.bf16.msra.mxu0 %v515
    %803 = vmatprep.subr.bf16.mxu0 %v512
    %804 = vmatpush1.bf16.msra.mxu0 %v511
    %805 = vmatprep.subr.bf16.mxu0 %v508
    %806 = vmatpush1.bf16.msra.mxu0 %v507
    %807 = vmatprep.subr.bf16.mxu0 %v568
    %808 = vmatpush2.bf16.msra.mxu0 %v567
    %809 = vmatprep.subr.bf16.mxu0 %v564
    %810 = vmatpush2.bf16.msra.mxu0 %v563
    %811 = vmatprep.subr.bf16.mxu0 %v560
    %812 = vmatpush2.bf16.msra.mxu0 %v559
    %813 = vmatprep.subr.bf16.mxu0 %v556
    %814 = vmatpush2.bf16.msra.mxu0 %v555
    %815 = vmatprep.subr.bf16.mxu0 %v552
    %816 = vmatpush2.bf16.msra.mxu0 %v551
    %817 = vmatprep.subr.bf16.mxu0 %v548
    %818 = vmatpush2.bf16.msra.mxu0 %v547
    %819 = vmatprep.subr.bf16.mxu0 %v544
    %820 = vmatpush2.bf16.msra.mxu0 %v543
    %821 = vmatprep.subr.bf16.mxu0 %v540
    %822 = vmatpush2.bf16.msra.mxu0 %v539
    %823 = vmatprep.mubr.bf16.mxu0 %v80
    %824 = vmatmul.mubr.bf16.gmra.mxu0 %v79
    %v825 = vpop.f32.mrf.mxu0
    %v826 = vadd.f32 %v196, %v825
    %v827 = vpop.f32.mrf.mxu0
    %v828 = vadd.f32 %v200, %v827
    %v829 = vpop.f32.mrf.mxu0
    %v830 = vpop.f32.mrf.mxu0
    %831 = vdwg.mxu0
    %832 = vmatprep.subr.bf16.mxu0 %v600
    %833 = vmatpush1.bf16.msra.mxu0 %v599
    %834 = vmatprep.subr.bf16.mxu0 %v596
    %835 = vmatpush1.bf16.msra.mxu0 %v595
    %836 = vmatprep.subr.bf16.mxu0 %v592
    %837 = vmatpush1.bf16.msra.mxu0 %v591
    %838 = vmatprep.subr.bf16.mxu0 %v588
    %839 = vmatpush1.bf16.msra.mxu0 %v587
    %840 = vmatprep.subr.bf16.mxu0 %v584
    %841 = vmatpush1.bf16.msra.mxu0 %v583
    %842 = vmatprep.subr.bf16.mxu0 %v580
    %843 = vmatpush1.bf16.msra.mxu0 %v579
    %844 = vmatprep.subr.bf16.mxu0 %v576
    %845 = vmatpush1.bf16.msra.mxu0 %v575
    %846 = vmatprep.subr.bf16.mxu0 %v572
    %847 = vmatpush1.bf16.msra.mxu0 %v571
    %848 = vmatprep.subr.bf16.mxu0 0
    %849 = vmatpush2.bf16.msra.mxu0 0
    %850 = vmatprep.subr.bf16.mxu0 0
    %851 = vmatpush2.bf16.msra.mxu0 0
    %852 = vmatprep.subr.bf16.mxu0 0
    %853 = vmatpush2.bf16.msra.mxu0 0
    %854 = vmatprep.subr.bf16.mxu0 0
    %855 = vmatpush2.bf16.msra.mxu0 0
    %856 = vmatprep.subr.bf16.mxu0 0
    %857 = vmatpush2.bf16.msra.mxu0 0
    %858 = vmatprep.subr.bf16.mxu0 0
    %859 = vmatpush2.bf16.msra.mxu0 0
    %860 = vmatprep.subr.bf16.mxu0 0
    %861 = vmatpush2.bf16.msra.mxu0 0
    %862 = vmatprep.subr.bf16.mxu0 %v604
    %863 = vmatpush2.bf16.msra.mxu0 %v603
    %864 = vmatprep.mubr.bf16.mxu0 %v707
    %865 = vmatmul.mubr.bf16.gmra.mxu0 %v81
    %v866 = vpop.f32.mrf.mxu0
    %v867 = vadd.f32 %v826, %v866
    %v868 = vpop.f32.mrf.mxu0
    %v869 = vadd.f32 %v828, %v868
    %v870 = vpop.f32.mrf.mxu0
    %v871 = vpop.f32.mrf.mxu0
    %872 = vdwg.mxu0
    %v873 = vmax.f32 %v785, 0.0
    %v874 = vmax.f32 %v787, 0.0
    %v875 = vmax.f32 %v867, 0.0
    %v876 = vmax.f32 %v869, 0.0
    %877 = vst [vmem:[%s14] sm:$0xff] %v873
    %878 = vst [vmem:[%s14 + $0x8] sm:$0xff] %v874
    %879 = vst [vmem:[%s14 + $0x10] sm:$0xff] %v875
    %880 = vst [vmem:[%s14 + $0x18] sm:$0xff] %v876
    %v881 = vpack.c.bf16 %v873, %v873
    %v882 = vpack.c.bf16 %v874, %v874
    %v883 = vpack.c.bf16 %v875, %v875
    %v884 = vpack.c.bf16 %v876, %v876
    %v885 = vld [vmem:[#allocation4] sm:$0xf]
    %v886 = vld [vmem:[#allocation4 + $0x4] sm:$0xf]
    %v887 = vld [vmem:[#allocation4 + $0x8] sm:$0xf]
    %v888 = vld [vmem:[#allocation4 + $0xc] sm:$0xf]
    %v889 = vld [vmem:[#allocation4 + $0x10] sm:$0xf]
    %v890 = vld [vmem:[#allocation4 + $0x14] sm:$0xf]
    %v891 = vld [vmem:[#allocation4 + $0x18] sm:$0xf]
    %v892 = vld [vmem:[#allocation4 + $0x1c] sm:$0xf]
    %v893 = vld [vmem:[#allocation4 + $0x20] sm:$0xf]
    %v894 = vld [vmem:[#allocation4 + $0x24] sm:$0xf]
    %v895 = vld [vmem:[#allocation4 + $0x28] sm:$0xf]
    %v896 = vld [vmem:[#allocation4 + $0x2c] sm:$0xf]
    %v897 = vld [vmem:[#allocation4 + $0x30] sm:$0xf]
    %v898 = vld [vmem:[#allocation4 + $0x34] sm:$0xf]
    %v899 = vld [vmem:[#allocation4 + $0x38] sm:$0xf]
    %v900 = vld [vmem:[#allocation4 + $0x3c] sm:$0xf]
    %v901 = vld [vmem:[#allocation4 + $0x40] sm:$0xf]
    %v902 = vld [vmem:[#allocation4 + $0x44] sm:$0xf]
    %v903 = vld [vmem:[#allocation4 + $0x48] sm:$0xf]
    %v904 = vld [vmem:[#allocation4 + $0x4c] sm:$0xf]
    %v905 = vld [vmem:[#allocation4 + $0x50] sm:$0xf]
    %v906 = vld [vmem:[#allocation4 + $0x54] sm:$0xf]
    %v907 = vld [vmem:[#allocation4 + $0x58] sm:$0xf]
    %v908 = vld [vmem:[#allocation4 + $0x5c] sm:$0xf]
    %v909 = vld [vmem:[#allocation4 + $0x60] sm:$0xf]
    %v910 = vld [vmem:[#allocation4 + $0x64] sm:$0xf]
    %v911 = vld [vmem:[#allocation4 + $0x68] sm:$0xf]
    %v912 = vld [vmem:[#allocation4 + $0x6c] sm:$0xf]
    %v913 = vld [vmem:[#allocation4 + $0x70] sm:$0xf]
    %v914 = vld [vmem:[#allocation4 + $0x74] sm:$0xf]
    %v915 = vld [vmem:[#allocation4 + $0x78] sm:$0xf]
    %v916 = vld [vmem:[#allocation4 + $0x7c] sm:$0xf]
    %v917 = vld [vmem:[#allocation4 + $0x80] sm:$0xf]
    %v918 = vld [vmem:[#allocation4 + $0x84] sm:$0xf]
    %v919 = vld [vmem:[#allocation4 + $0x88] sm:$0xf]
    %v920 = vld [vmem:[#allocation4 + $0x8c] sm:$0xf]
    %v921 = vld [vmem:[#allocation4 + $0x90] sm:$0xf]
    %v922 = vld [vmem:[#allocation4 + $0x94] sm:$0xf]
    %v923 = vld [vmem:[#allocation4 + $0x98] sm:$0xf]
    %v924 = vld [vmem:[#allocation4 + $0x9c] sm:$0xf]
    %v925 = vld [vmem:[#allocation4 + $0xa0] sm:$0xf]
    %v926 = vld [vmem:[#allocation4 + $0xa4] sm:$0xf]
    %v927 = vld [vmem:[#allocation4 + $0xa8] sm:$0xf]
    %v928 = vld [vmem:[#allocation4 + $0xac] sm:$0xf]
    %v929 = vld [vmem:[#allocation4 + $0xb0] sm:$0xf]
    %v930 = vld [vmem:[#allocation4 + $0xb4] sm:$0xf]
    %v931 = vld [vmem:[#allocation4 + $0xb8] sm:$0xf]
    %v932 = vld [vmem:[#allocation4 + $0xbc] sm:$0xf]
    %v933 = vld [vmem:[#allocation4 + $0xc0] sm:$0xf]
    %v934 = vld [vmem:[#allocation4 + $0xc4] sm:$0xf]
    %v935 = vld [vmem:[#allocation4 + $0xc8] sm:$0xf]
    %v936 = vld [vmem:[#allocation4 + $0xcc] sm:$0xf]
    %v937 = vld [vmem:[#allocation4 + $0xd0] sm:$0xf]
    %v938 = vld [vmem:[#allocation4 + $0xd4] sm:$0xf]
    %v939 = vld [vmem:[#allocation4 + $0xd8] sm:$0xf]
    %v940 = vld [vmem:[#allocation4 + $0xdc] sm:$0xf]
    %v941 = vld [vmem:[#allocation4 + $0xe0] sm:$0xf]
    %v942 = vld [vmem:[#allocation4 + $0xe4] sm:$0xf]
    %v943 = vld [vmem:[#allocation4 + $0xe8] sm:$0xf]
    %v944 = vld [vmem:[#allocation4 + $0xec] sm:$0xf]
    %v945 = vld [vmem:[#allocation4 + $0xf0] sm:$0xf]
    %v946 = vld [vmem:[#allocation4 + $0xf4] sm:$0xf]
    %v947 = vld [vmem:[#allocation4 + $0xf8] sm:$0xf]
    %v948 = vld [vmem:[#allocation4 + $0xfc] sm:$0xf]
    %v949 = vld [vmem:[%s4] sm:$0x1]
    %v951 = vlaneseq
    %v952 = vshrl.u32 %v951, 7
    %v953 = vsub.s32 0, %v952
    %v954 = vrot.slane %v949, %v953
    %v1020 = vunpack.c.l.b16 %v885
    %v1021 = vunpack.c.l.b16 %v886
    %v1022 = vunpack.c.l.b16 %v887
    %v1023 = vunpack.c.l.b16 %v888
    %v1024 = vunpack.c.l.b16 %v889
    %v1025 = vunpack.c.l.b16 %v890
    %v1026 = vunpack.c.l.b16 %v891
    %v1027 = vunpack.c.l.b16 %v892
    %v1028 = vunpack.c.l.b16 %v893
    %v1029 = vunpack.c.l.b16 %v894
    %v1030 = vunpack.c.l.b16 %v895
    %v1031 = vunpack.c.l.b16 %v896
    %v1032 = vunpack.c.l.b16 %v897
    %v1033 = vunpack.c.l.b16 %v898
    %v1034 = vunpack.c.l.b16 %v899
    %v1035 = vunpack.c.l.b16 %v900
    %v1036 = vunpack.c.l.b16 %v901
    %v1037 = vunpack.c.l.b16 %v902
    %v1038 = vunpack.c.l.b16 %v903
    %v1039 = vunpack.c.l.b16 %v904
    %v1040 = vunpack.c.l.b16 %v905
    %v1041 = vunpack.c.l.b16 %v906
    %v1042 = vunpack.c.l.b16 %v907
    %v1043 = vunpack.c.l.b16 %v908
    %v1044 = vunpack.c.l.b16 %v909
    %v1045 = vunpack.c.l.b16 %v910
    %v1046 = vunpack.c.l.b16 %v911
    %v1047 = vunpack.c.l.b16 %v912
    %v1048 = vunpack.c.l.b16 %v913
    %v1049 = vunpack.c.l.b16 %v914
    %v1050 = vunpack.c.l.b16 %v915
    %v1051 = vunpack.c.l.b16 %v916
    %v1052 = vunpack.c.l.b16 %v917
    %v1053 = vunpack.c.l.b16 %v918
    %v1054 = vunpack.c.l.b16 %v919
    %v1055 = vunpack.c.l.b16 %v920
    %v1056 = vunpack.c.l.b16 %v921
    %v1057 = vunpack.c.l.b16 %v922
    %v1058 = vunpack.c.l.b16 %v923
    %v1059 = vunpack.c.l.b16 %v924
    %v1060 = vunpack.c.l.b16 %v925
    %v1061 = vunpack.c.l.b16 %v926
    %v1062 = vunpack.c.l.b16 %v927
    %v1063 = vunpack.c.l.b16 %v928
    %v1064 = vunpack.c.l.b16 %v929
    %v1065 = vunpack.c.l.b16 %v930
    %v1066 = vunpack.c.l.b16 %v931
    %v1067 = vunpack.c.l.b16 %v932
    %v1068 = vunpack.c.l.b16 %v933
    %v1069 = vunpack.c.l.b16 %v934
    %v1070 = vunpack.c.l.b16 %v935
    %v1071 = vunpack.c.l.b16 %v936
    %v1072 = vunpack.c.l.b16 %v937
    %v1073 = vunpack.c.l.b16 %v938
    %v1074 = vunpack.c.l.b16 %v939
    %v1075 = vunpack.c.l.b16 %v940
    %v1076 = vunpack.c.l.b16 %v941
    %v1077 = vunpack.c.l.b16 %v942
    %v1078 = vunpack.c.l.b16 %v943
    %v1079 = vunpack.c.l.b16 %v944
    %v1080 = vunpack.c.l.b16 %v945
    %v1081 = vunpack.c.l.b16 %v946
    %v1082 = vunpack.c.l.b16 %v947
    %v1083 = vunpack.c.l.b16 %v948
    %v1084 = vpack.c.b16 %v1021, %v1020
    %v1085 = vpack.c.b16 %v1023, %v1022
    %v1086 = vpack.c.b16 %v1025, %v1024
    %v1087 = vpack.c.b16 %v1027, %v1026
    %v1088 = vpack.c.b16 %v1029, %v1028
    %v1089 = vpack.c.b16 %v1031, %v1030
    %v1090 = vpack.c.b16 %v1033, %v1032
    %v1091 = vpack.c.b16 %v1035, %v1034
    %v1092 = vpack.c.b16 %v1037, %v1036
    %v1093 = vpack.c.b16 %v1039, %v1038
    %v1094 = vpack.c.b16 %v1041, %v1040
    %v1095 = vpack.c.b16 %v1043, %v1042
    %v1096 = vpack.c.b16 %v1045, %v1044
    %v1097 = vpack.c.b16 %v1047, %v1046
    %v1098 = vpack.c.b16 %v1049, %v1048
    %v1099 = vpack.c.b16 %v1051, %v1050
    %v1100 = vpack.c.b16 %v1053, %v1052
    %v1101 = vpack.c.b16 %v1055, %v1054
    %v1102 = vpack.c.b16 %v1057, %v1056
    %v1103 = vpack.c.b16 %v1059, %v1058
    %v1104 = vpack.c.b16 %v1061, %v1060
    %v1105 = vpack.c.b16 %v1063, %v1062
    %v1106 = vpack.c.b16 %v1065, %v1064
    %v1107 = vpack.c.b16 %v1067, %v1066
    %v1108 = vpack.c.b16 %v1069, %v1068
    %v1109 = vpack.c.b16 %v1071, %v1070
    %v1110 = vpack.c.b16 %v1073, %v1072
    %v1111 = vpack.c.b16 %v1075, %v1074
    %v1112 = vpack.c.b16 %v1077, %v1076
    %v1113 = vpack.c.b16 %v1079, %v1078
    %v1114 = vpack.c.b16 %v1081, %v1080
    %v1115 = vpack.c.b16 %v1083, %v1082
    %1148 = vmatprep.subr.bf16.mxu0 0
    %1149 = vmatpush1.bf16.msra.mxu0 %v1091
    %1150 = vmatprep.subr.bf16.mxu0 0
    %1151 = vmatpush1.bf16.msra.mxu0 %v1090
    %1152 = vmatprep.subr.bf16.mxu0 0
    %1153 = vmatpush1.bf16.msra.mxu0 %v1089
    %1154 = vmatprep.subr.bf16.mxu0 0
    %1155 = vmatpush1.bf16.msra.mxu0 %v1088
    %1156 = vmatprep.subr.bf16.mxu0 0
    %1157 = vmatpush1.bf16.msra.mxu0 %v1087
    %1158 = vmatprep.subr.bf16.mxu0 0
    %1159 = vmatpush1.bf16.msra.mxu0 %v1086
    %1160 = vmatprep.subr.bf16.mxu0 0
    %1161 = vmatpush1.bf16.msra.mxu0 %v1085
    %1162 = vmatprep.subr.bf16.mxu0 0
    %1163 = vmatpush1.bf16.msra.mxu0 %v1084
    %1164 = vmatprep.subr.bf16.mxu0 0
    %1165 = vmatpush2.bf16.msra.mxu0 %v1099
    %1166 = vmatprep.subr.bf16.mxu0 0
    %1167 = vmatpush2.bf16.msra.mxu0 %v1098
    %1168 = vmatprep.subr.bf16.mxu0 0
    %1169 = vmatpush2.bf16.msra.mxu0 %v1097
    %1170 = vmatprep.subr.bf16.mxu0 0
    %1171 = vmatpush2.bf16.msra.mxu0 %v1096
    %1172 = vmatprep.subr.bf16.mxu0 0
    %1173 = vmatpush2.bf16.msra.mxu0 %v1095
    %1174 = vmatprep.subr.bf16.mxu0 0
    %1175 = vmatpush2.bf16.msra.mxu0 %v1094
    %1176 = vmatprep.subr.bf16.mxu0 0
    %1177 = vmatpush2.bf16.msra.mxu0 %v1093
    %1178 = vmatprep.subr.bf16.mxu0 0
    %1179 = vmatpush2.bf16.msra.mxu0 %v1092
    %1180 = vmatprep.mubr.bf16.mxu0 %v882
    %1181 = vmatmul.mubr.bf16.gmra.mxu0 %v881
    %v1182 = vpop.f32.mrf.mxu0
    %v1183 = vadd.f32 %v954, %v1182
    %v1184 = vpop.f32.mrf.mxu0
    %v1185 = vpop.f32.mrf.mxu0
    %v1186 = vpop.f32.mrf.mxu0
    %1187 = vdwg.mxu0
    %1188 = vmatprep.subr.bf16.mxu0 0
    %1189 = vmatpush1.bf16.msra.mxu0 %v1107
    %1190 = vmatprep.subr.bf16.mxu0 0
    %1191 = vmatpush1.bf16.msra.mxu0 %v1106
    %1192 = vmatprep.subr.bf16.mxu0 0
    %1193 = vmatpush1.bf16.msra.mxu0 %v1105
    %1194 = vmatprep.subr.bf16.mxu0 0
    %1195 = vmatpush1.bf16.msra.mxu0 %v1104
    %1196 = vmatprep.subr.bf16.mxu0 0
    %1197 = vmatpush1.bf16.msra.mxu0 %v1103
    %1198 = vmatprep.subr.bf16.mxu0 0
    %1199 = vmatpush1.bf16.msra.mxu0 %v1102
    %1200 = vmatprep.subr.bf16.mxu0 0
    %1201 = vmatpush1.bf16.msra.mxu0 %v1101
    %1202 = vmatprep.subr.bf16.mxu0 0
    %1203 = vmatpush1.bf16.msra.mxu0 %v1100
    %1204 = vmatprep.subr.bf16.mxu0 0
    %1205 = vmatpush2.bf16.msra.mxu0 %v1115
    %1206 = vmatprep.subr.bf16.mxu0 0
    %1207 = vmatpush2.bf16.msra.mxu0 %v1114
    %1208 = vmatprep.subr.bf16.mxu0 0
    %1209 = vmatpush2.bf16.msra.mxu0 %v1113
    %1210 = vmatprep.subr.bf16.mxu0 0
    %1211 = vmatpush2.bf16.msra.mxu0 %v1112
    %1212 = vmatprep.subr.bf16.mxu0 0
    %1213 = vmatpush2.bf16.msra.mxu0 %v1111
    %1214 = vmatprep.subr.bf16.mxu0 0
    %1215 = vmatpush2.bf16.msra.mxu0 %v1110
    %1216 = vmatprep.subr.bf16.mxu0 0
    %1217 = vmatpush2.bf16.msra.mxu0 %v1109
    %1218 = vmatprep.subr.bf16.mxu0 0
    %1219 = vmatpush2.bf16.msra.mxu0 %v1108
    %1220 = vmatprep.mubr.bf16.mxu0 %v884
    %1221 = vmatmul.mubr.bf16.gmra.mxu0 %v883
    %v1222 = vpop.f32.mrf.mxu0
    %v1223 = vadd.f32 %v1183, %v1222
    %v1224 = vpop.f32.mrf.mxu0
    %v1225 = vpop.f32.mrf.mxu0
    %v1226 = vpop.f32.mrf.mxu0
    %1227 = vdwg.mxu0
    %v1228 = vmax.f32 %v1223, 0.0
    %v1229 = vpack.c.bf16 %v1228, %v1228
    %v1230 = vld [vmem:[%s5] sm:$0xf]
    %v1231 = vld [vmem:[%s5 + $0x4] sm:$0xf]
    %v1232 = vld [vmem:[%s5 + $0x8] sm:$0xf]
    %v1233 = vld [vmem:[%s5 + $0xc] sm:$0xf]
    %v1234 = vld [vmem:[%s5 + $0x10] sm:$0xf]
    %v1235 = vld [vmem:[%s5 + $0x14] sm:$0xf]
    %v1236 = vld [vmem:[%s5 + $0x18] sm:$0xf]
    %v1237 = vld [vmem:[%s5 + $0x1c] sm:$0xf]
    %v1238 = vld [vmem:[%s5 + $0x20] sm:$0xf]
    %v1239 = vld [vmem:[%s5 + $0x24] sm:$0xf]
    %v1240 = vld [vmem:[%s5 + $0x28] sm:$0xf]
    %v1241 = vld [vmem:[%s5 + $0x2c] sm:$0xf]
    %v1242 = vld [vmem:[%s5 + $0x30] sm:$0xf]
    %v1243 = vld [vmem:[%s5 + $0x34] sm:$0xf]
    %v1244 = vld [vmem:[%s5 + $0x38] sm:$0xf]
    %v1245 = vld [vmem:[%s5 + $0x3c] sm:$0xf]
    %v1246 = vld [vmem:[%s6] sm:$0x1]
    %v1248 = vlaneseq
    %v1249 = vshrl.u32 %v1248, 7
    %v1250 = vsub.s32 0, %v1249
    %v1251 = vrot.slane %v1246, %v1250
    %v1269 = vunpack.c.l.b16 %v1230
    %v1270 = vunpack.c.l.b16 %v1231
    %v1271 = vunpack.c.l.b16 %v1232
    %v1272 = vunpack.c.l.b16 %v1233
    %v1273 = vunpack.c.l.b16 %v1234
    %v1274 = vunpack.c.l.b16 %v1235
    %v1275 = vunpack.c.l.b16 %v1236
    %v1276 = vunpack.c.l.b16 %v1237
    %v1277 = vunpack.c.l.b16 %v1238
    %v1278 = vunpack.c.l.b16 %v1239
    %v1279 = vunpack.c.l.b16 %v1240
    %v1280 = vunpack.c.l.b16 %v1241
    %v1281 = vunpack.c.l.b16 %v1242
    %v1282 = vunpack.c.l.b16 %v1243
    %v1283 = vunpack.c.l.b16 %v1244
    %v1284 = vunpack.c.l.b16 %v1245
    %v1285 = vpack.c.b16 %v1270, %v1269
    %v1286 = vpack.c.b16 %v1272, %v1271
    %v1287 = vpack.c.b16 %v1274, %v1273
    %v1288 = vpack.c.b16 %v1276, %v1275
    %v1289 = vpack.c.b16 %v1278, %v1277
    %v1290 = vpack.c.b16 %v1280, %v1279
    %v1291 = vpack.c.b16 %v1282, %v1281
    %v1292 = vpack.c.b16 %v1284, %v1283
    %1301 = vmatprep.subr.bf16.mxu0 0
    %1302 = vmatpush1.bf16.msra.mxu0 %v1292
    %1303 = vmatprep.subr.bf16.mxu0 0
    %1304 = vmatpush1.bf16.msra.mxu0 %v1291
    %1305 = vmatprep.subr.bf16.mxu0 0
    %1306 = vmatpush1.bf16.msra.mxu0 %v1290
    %1307 = vmatprep.subr.bf16.mxu0 0
    %1308 = vmatpush1.bf16.msra.mxu0 %v1289
    %1309 = vmatprep.subr.bf16.mxu0 0
    %1310 = vmatpush1.bf16.msra.mxu0 %v1288
    %1311 = vmatprep.subr.bf16.mxu0 0
    %1312 = vmatpush1.bf16.msra.mxu0 %v1287
    %1313 = vmatprep.subr.bf16.mxu0 0
    %1314 = vmatpush1.bf16.msra.mxu0 %v1286
    %1315 = vmatprep.subr.bf16.mxu0 0
    %1316 = vmatpush1.bf16.msra.mxu0 %v1285
    %1317 = vmatprep.subr.bf16.mxu0 0
    %1318 = vmatpush2.bf16.msra.mxu0 0
    %1319 = vmatprep.subr.bf16.mxu0 0
    %1320 = vmatpush2.bf16.msra.mxu0 0
    %1321 = vmatprep.subr.bf16.mxu0 0
    %1322 = vmatpush2.bf16.msra.mxu0 0
    %1323 = vmatprep.subr.bf16.mxu0 0
    %1324 = vmatpush2.bf16.msra.mxu0 0
    %1325 = vmatprep.subr.bf16.mxu0 0
    %1326 = vmatpush2.bf16.msra.mxu0 0
    %1327 = vmatprep.subr.bf16.mxu0 0
    %1328 = vmatpush2.bf16.msra.mxu0 0
    %1329 = vmatprep.subr.bf16.mxu0 0
    %1330 = vmatpush2.bf16.msra.mxu0 0
    %1331 = vmatprep.subr.bf16.mxu0 0
    %1332 = vmatpush2.bf16.msra.mxu0 0
    %1333 = vmatprep.mubr.bf16.mxu0 0
    %1334 = vmatmul.mubr.bf16.gmra.mxu0 %v1229
    %v1335 = vpop.f32.mrf.mxu0
    %v1336 = vadd.f32 %v1251, %v1335
    %v1337 = vpop.f32.mrf.mxu0
    %v1338 = vpop.f32.mrf.mxu0
    %v1339 = vpop.f32.mrf.mxu0
    %1340 = vdwg.mxu0
    %v1341 = vmax.f32 %v1336, 0.0
    %v1342 = vpack.c.bf16 %v1341, %v1341
    %v1343 = vld [vmem:[%s7] sm:$0xf]
    %v1344 = vld [vmem:[%s7 + $0x4] sm:$0xf]
    %v1345 = vld [vmem:[%s11] sm:$0xff]
    %v1346 = vld [vmem:[%s8] sm:$0x1]
    %1348 = vset.pattern.permute.xlu0 0
    %1349 = vperm.xlu0 %1348, %v1345
    %v1350 = vpop.permute.xlu0 %1349
    %v1353 = vlaneseq
    %v1354 = vshrl.u32 %v1353, 7
    %v1355 = vsub.s32 0, %v1354
    %v1356 = vrot.slane %v1346, %v1355
    %v1358 = vmul.f32 %v1350, %v1356
    %v1361 = vunpack.c.l.b16 %v1343
    %v1362 = vunpack.c.l.b16 %v1344
    %v1363 = vpack.c.b16 %v1362, %v1361
    %v1366 = vsel %vm705, %v1342, 0
    %1368 = vmatprep.subr.bf16.mxu0 0
    %1369 = vmatpush1.bf16.msra.mxu0 0
    %1370 = vmatprep.subr.bf16.mxu0 0
    %1371 = vmatpush1.bf16.msra.mxu0 0
    %1372 = vmatprep.subr.bf16.mxu0 0
    %1373 = vmatpush1.bf16.msra.mxu0 0
    %1374 = vmatprep.subr.bf16.mxu0 0
    %1375 = vmatpush1.bf16.msra.mxu0 0
    %1376 = vmatprep.subr.bf16.mxu0 0
    %1377 = vmatpush1.bf16.msra.mxu0 0
    %1378 = vmatprep.subr.bf16.mxu0 0
    %1379 = vmatpush1.bf16.msra.mxu0 0
    %1380 = vmatprep.subr.bf16.mxu0 0
    %1381 = vmatpush1.bf16.msra.mxu0 0
    %1382 = vmatprep.subr.bf16.mxu0 0
    %1383 = vmatpush1.bf16.msra.mxu0 %v1363
    %1384 = vmatprep.subr.bf16.mxu0 0
    %1385 = vmatpush2.bf16.msra.mxu0 0
    %1386 = vmatprep.subr.bf16.mxu0 0
    %1387 = vmatpush2.bf16.msra.mxu0 0
    %1388 = vmatprep.subr.bf16.mxu0 0
    %1389 = vmatpush2.bf16.msra.mxu0 0
    %1390 = vmatprep.subr.bf16.mxu0 0
    %1391 = vmatpush2.bf16.msra.mxu0 0
    %1392 = vmatprep.subr.bf16.mxu0 0
    %1393 = vmatpush2.bf16.msra.mxu0 0
    %1394 = vmatprep.subr.bf16.mxu0 0
    %1395 = vmatpush2.bf16.msra.mxu0 0
    %1396 = vmatprep.subr.bf16.mxu0 0
    %1397 = vmatpush2.bf16.msra.mxu0 0
    %1398 = vmatprep.subr.bf16.mxu0 0
    %1399 = vmatpush2.bf16.msra.mxu0 0
    %1400 = vmatprep.mubr.bf16.mxu0 0
    %1401 = vmatmul.mubr.bf16.gmra.mxu0 %v1366
    %v1402 = vpop.f32.mrf.mxu0
    %v1403 = vadd.f32 %v1358, %v1402
    %v1404 = vpop.f32.mrf.mxu0
    %v1405 = vpop.f32.mrf.mxu0
    %v1406 = vpop.f32.mrf.mxu0
    %1407 = vdwg.mxu0
    %v1408 = vld [vmem:[%s12] sm:$0xff]
    %v1409 = vld [vmem:[%s9] sm:$0x1]
    %1411 = vset.pattern.permute.xlu0 0
    %1412 = vperm.xlu0 %1411, %v1408
    %v1413 = vpop.permute.xlu0 %1412
    %v1416 = vlaneseq
    %v1417 = vshrl.u32 %v1416, 7
    %v1418 = vsub.s32 0, %v1417
    %v1419 = vrot.slane %v1409, %v1418
    %v1421 = vmul.f32 %v1413, %v1419
    %v1422 = vadd.f32 %v1403, %v1421
    %v1423 = vld [vmem:[%s10] sm:$0x1]
    %v1425 = vlaneseq
    %v1426 = vshrl.u32 %v1425, 7
    %v1427 = vsub.s32 0, %v1426
    %v1428 = vrot.slane %v1423, %v1427
    %v1430 = vadd.f32 %v1422, %v1428
    %1431 = vst [vmem:[%s13] sm:$0xff] %v1430
    // Predicated region
    $region62: #{volume_model_forward.1} parent=1 // pred_check
      _
    $region63: #{volume_model_forward.1} parent=1 // pred_check_branch
      %1433 = sbr.rel (0) target = $region65
    $region64: #{volume_model_forward.1} parent=1 // pred_region
      _
    $region65: #{volume_model_forward.1} parent=1 // pred_fallthru
      _
    // Predicated region
    $region66: #{volume_model_forward.1} parent=1 // pred_check
      _
    $region67: #{volume_model_forward.1} parent=1 // pred_check_branch
      %1435 = sbr.rel (0) target = $region69
    $region68: #{volume_model_forward.1} parent=1 // pred_region
      _
    $region69: #{volume_model_forward.1} parent=1 // pred_fallthru
      _
    // Predicated region
    $region70: #{volume_model_forward.1} parent=1 // pred_check
      _
    $region71: #{volume_model_forward.1} parent=1 // pred_check_branch
      %1437 = sbr.rel (0) target = $region73
    $region72: #{volume_model_forward.1} parent=1 // pred_region
      _
    $region73: #{volume_model_forward.1} parent=1 // pred_fallthru
      _
    // Predicated region
    $region74: #{volume_model_forward.1} parent=1 // pred_check
      _
    $region75: #{volume_model_forward.1} parent=1 // pred_check_branch
      %1439 = sbr.rel (0) target = $region77
    $region76: #{volume_model_forward.1} parent=1 // pred_region
      _
    $region77: #{volume_model_forward.1} parent=1 // pred_fallthru
      _
    %1440 = vsyncpa [#allocation3], 1
    %1441 = vsyncpa [#allocation5], 1

</llo_original>
